<compile_context>
chip_gen: v7x
topology: tpu7x:2x2x1
jax: 0.10.0
libtpu: 0.0.40
codegen_flags: <defaults>
</compile_context>

<pallas_src>
import numpy as np
import jax
import jax.numpy as jnp
from jax import lax
from jax.experimental import pallas as pl
from jax.experimental.pallas import tpu as pltpu

_LANE = 128


def _round_up(x, m):
    return ((x + m - 1) // m) * m


def _floor_lane(x):
    return max(_LANE, (x // _LANE) * _LANE)


def _backbone_update_kernel(w_ref, b_ref, s_ref, out_ref):
    # w_ref:   (6, C_s)   VMEM, resident (PyTorch [out, in] orientation)
    # b_ref:   (6,)       SMEM, f32 scalars
    # s_ref:   (TM, C_s)  VMEM, native dtype (f32 or bf16)
    # out_ref: (12, TM)   VMEM out, f32: rows 0..8 rotation (row-major), 9..11 trans

    # Linear layer on the MXU, contracting C_s on both operands:
    #   (6, C_s) x (TM, C_s)^T -> (6, TM), f32 accumulation.
    params = lax.dot_general(
        w_ref[...], s_ref[...],
        dimension_numbers=(((1,), (1,)), ((), ())),
        preferred_element_type=jnp.float32,
    )

    # Lane-dense (1, TM) rows; bias added as SMEM scalar broadcasts.
    qx = params[0:1, :] + b_ref[0]
    qy = params[1:2, :] + b_ref[1]
    qz = params[2:3, :] + b_ref[2]
    t0 = params[3:4, :] + b_ref[3]
    t1 = params[4:5, :] + b_ref[4]
    t2 = params[5:6, :] + b_ref[5]

    # (1, qx, qy, qz) / sqrt(1 + |q|^2)  via a single rsqrt (EUP slot).
    inv = lax.rsqrt(qx * qx + qy * qy + qz * qz + 1.0)
    a = inv
    b = qx * inv
    c = qy * inv
    d = qz * inv

    aa, bb, cc, dd = a * a, b * b, c * c, d * d
    ab, ac, ad = a * b, a * c, a * d
    bc, bd, cd = b * c, b * d, c * d

    r00 = aa + bb - cc - dd
    r01 = 2.0 * (bc - ad)
    r02 = 2.0 * (bd + ac)
    r10 = 2.0 * (bc + ad)
    r11 = aa - bb + cc - dd
    r12 = 2.0 * (cd - ab)
    r20 = 2.0 * (bd - ac)
    r21 = 2.0 * (cd + ab)
    r22 = aa - bb - cc + dd

    # Stack on the non-lane (sublane) axis -> one full-lane (12, TM) store.
    out = jnp.concatenate(
        [r00, r01, r02, r10, r11, r12, r20, r21, r22, t0, t1, t2], axis=0)
    out_ref[...] = out.astype(out_ref.dtype)


def backbone_update(s, weight, bias, *, tm=1024):
    """s: [*, N_res, C_s]; weight: [6, C_s] (PyTorch convention); bias: [6]."""
    lead_shape = s.shape[:-1]
    c_s = s.shape[-1]
    M = int(np.prod(lead_shape)) if lead_shape else 1

    # Row tile: always a multiple of 128 (residues sit on the output lane axis),
    # as large as requested but no larger than needed for M.
    tm_eff = min(_floor_lane(tm), _round_up(M, _LANE))
    # VMEM cap: keep the double-buffered s tile <= ~2 x 4 MiB even for wide C_s.
    bytes_per_row = c_s * s.dtype.itemsize
    tm_eff = min(tm_eff, _floor_lane((4 << 20) // max(1, bytes_per_row)))
    grid_m = pl.cdiv(M, tm_eff)
    # Keep >= 2 grid steps when possible so v7x's two TensorCores both get work.
    if grid_m < 2 and tm_eff >= 2 * _LANE:
        tm_eff = _floor_lane(tm_eff // 2)
        grid_m = pl.cdiv(M, tm_eff)

    # Keep the native dtype of s (no extra HBM pass for an upcast); weight
    # matches the MXU operand dtype, bias stays f32 for the scalar path.
    s2 = s.reshape(M, c_s)
    w = weight.astype(s2.dtype)
    b = bias.astype(jnp.float32)

    # Advisory cost hint: this op is HBM-bound on reading s.
    bytes_accessed = (s2.size * s2.dtype.itemsize
                      + 12 * M * 4
                      + w.size * w.dtype.itemsize)
    cost = pl.CostEstimate(flops=2 * 6 * c_s * M + 40 * M,
                           transcendentals=M,
                           bytes_accessed=bytes_accessed)

    out = pl.pallas_call(
        _backbone_update_kernel,
        out_shape=jax.ShapeDtypeStruct((12, M), jnp.float32),
        grid=(grid_m,),
        in_specs=[
            pl.BlockSpec((6, c_s), lambda i: (0, 0)),            # weight (resident)
            pl.BlockSpec(memory_space=pltpu.MemorySpace.SMEM),   # bias scalars
            pl.BlockSpec((tm_eff, c_s), lambda i: (i, 0)),       # s row tile
        ],
        out_specs=pl.BlockSpec((12, tm_eff), lambda i: (0, i)),  # fused lane-dense slab
        compiler_params=pltpu.CompilerParams(
            dimension_semantics=("parallel",)),
        cost_estimate=cost,
    )(w, b, s2)

    out_t = out.T                                   # (M, 12)
    rots = out_t[:, 0:9].reshape(lead_shape + (3, 3)).astype(s.dtype)
    trans = out_t[:, 9:12].reshape(lead_shape + (3,)).astype(s.dtype)
    return rots, trans


def _reference(s, weight, bias):
    """Plain-JAX reference replicating the PyTorch forward."""
    params = jnp.einsum("...c,oc->...o", s, weight) + bias
    q, t = params[..., :3], params[..., 3:]
    denom = jnp.sqrt(jnp.sum(q * q, axis=-1, keepdims=True) + 1.0)
    quat = jnp.concatenate([jnp.ones_like(q[..., :1]), q], axis=-1) / denom
    a, b, c, d = (quat[..., 0], quat[..., 1], quat[..., 2], quat[..., 3])
    rot = jnp.stack([
        a * a + b * b - c * c - d * d, 2 * (b * c - a * d), 2 * (b * d + a * c),
        2 * (b * c + a * d), a * a - b * b + c * c - d * d, 2 * (c * d - a * b),
        2 * (b * d - a * c), 2 * (c * d + a * b), a * a - b * b - c * c + d * d,
    ], axis=-1).reshape(q.shape[:-1] + (3, 3))
    return rot, t


if __name__ == "__main__":
    # Small shapes: batch=2, N_res=8, C_s=32  ->  s: [2, 8, 32]
    B, N_RES, C_S = 2, 8, 32
    key = jax.random.PRNGKey(0)
    k_s, k_w, k_b = jax.random.split(key, 3)

    s = jax.random.normal(k_s, (B, N_RES, C_S), dtype=jnp.float32)
    # NOTE: openfold's init='final' zero-inits the Linear; we use small random
    # parameters here so the kernel computation is non-trivial (synthetic init).
    weight = 0.1 * jax.random.normal(k_w, (6, C_S), dtype=jnp.float32)
    bias = 0.1 * jax.random.normal(k_b, (6,), dtype=jnp.float32)

    rots, trans = backbone_update(s, weight, bias)
    jax.block_until_ready((rots, trans))

    rots_ref, trans_ref = _reference(s, weight, bias)
    np.testing.assert_allclose(np.asarray(rots), np.asarray(rots_ref),
                               rtol=1e-5, atol=1e-5)
    np.testing.assert_allclose(np.asarray(trans), np.asarray(trans_ref),
                               rtol=1e-5, atol=1e-5)
    assert rots.shape == (B, N_RES, 3, 3) and trans.shape == (B, N_RES, 3)

    print("KERNEL_OK")
</pallas_src>

<mosaic_0001>
module attributes {stable_mosaic.version = 11 : i64} {
  func.func @_backbone_update_kernel(%arg0: i32, %arg1: memref<6x32xf32, #tpu.memory_space<vmem>>, %arg2: memref<6xf32, #tpu.memory_space<smem>>, %arg3: memref<128x32xf32, #tpu.memory_space<vmem>>, %arg4: memref<12x128xf32, #tpu.memory_space<vmem>>) attributes {dimension_semantics = [#tpu.dimension_semantics<parallel>], iteration_bounds = array<i64: 1>, scalar_prefetch = 0 : i64, scratch_operands = 0 : i64, tpu.core_type = #tpu.core_type<tc>, window_params = [{pipeline_mode = #tpu.pipeline_mode<synchronous>, transform_indices = @transform_0, window_bounds = array<i64: 6, 32>}, {transform_indices = @transform_1, window_bounds = array<i64: 6>}, {transform_indices = @transform_2, window_bounds = array<i64: 128, 32>}, {transform_indices = @transform_3, window_bounds = array<i64: 12, 128>}]} {
    %c0 = arith.constant 0 : index
    %c0_0 = arith.constant 0 : index
    %0 = vector.load %arg1[%c0, %c0_0] : memref<6x32xf32, #tpu.memory_space<vmem>>, vector<6x32xf32>
    %c0_1 = arith.constant 0 : index
    %c0_2 = arith.constant 0 : index
    %1 = vector.load %arg3[%c0_1, %c0_2] : memref<128x32xf32, #tpu.memory_space<vmem>>, vector<128x32xf32>
    %cst = arith.constant dense<0.000000e+00> : vector<6x128xf32>
    %2 = tpu.matmul %0, %1, %cst {dimension_numbers = #tpu.dot_dimension_numbers<[1], [1], [0], [0], [0, 0, 1, 0], [], []>} : vector<6x32xf32>, vector<128x32xf32>, vector<6x128xf32> -> vector<6x128xf32>
    %3 = vector.extract_strided_slice %2 {offsets = [0, 0], sizes = [1, 128], strides = [1, 1]} : vector<6x128xf32> to vector<1x128xf32>
    %c0_3 = arith.constant 0 : index
    %4 = memref.load %arg2[%c0_3] : memref<6xf32, #tpu.memory_space<smem>>
    %5 = vector.broadcast %4 : f32 to vector<1x128xf32>
    %6 = arith.addf %3, %5 : vector<1x128xf32>
    %7 = vector.extract_strided_slice %2 {offsets = [1, 0], sizes = [1, 128], strides = [1, 1]} : vector<6x128xf32> to vector<1x128xf32>
    %c1 = arith.constant 1 : index
    %8 = memref.load %arg2[%c1] : memref<6xf32, #tpu.memory_space<smem>>
    %9 = vector.broadcast %8 : f32 to vector<1x128xf32>
    %10 = arith.addf %7, %9 : vector<1x128xf32>
    %11 = vector.extract_strided_slice %2 {offsets = [2, 0], sizes = [1, 128], strides = [1, 1]} : vector<6x128xf32> to vector<1x128xf32>
    %c2 = arith.constant 2 : index
    %12 = memref.load %arg2[%c2] : memref<6xf32, #tpu.memory_space<smem>>
    %13 = vector.broadcast %12 : f32 to vector<1x128xf32>
    %14 = arith.addf %11, %13 : vector<1x128xf32>
    %15 = vector.extract_strided_slice %2 {offsets = [3, 0], sizes = [1, 128], strides = [1, 1]} : vector<6x128xf32> to vector<1x128xf32>
    %c3 = arith.constant 3 : index
    %16 = memref.load %arg2[%c3] : memref<6xf32, #tpu.memory_space<smem>>
    %17 = vector.broadcast %16 : f32 to vector<1x128xf32>
    %18 = arith.addf %15, %17 : vector<1x128xf32>
    %19 = vector.extract_strided_slice %2 {offsets = [4, 0], sizes = [1, 128], strides = [1, 1]} : vector<6x128xf32> to vector<1x128xf32>
    %c4 = arith.constant 4 : index
    %20 = memref.load %arg2[%c4] : memref<6xf32, #tpu.memory_space<smem>>
    %21 = vector.broadcast %20 : f32 to vector<1x128xf32>
    %22 = arith.addf %19, %21 : vector<1x128xf32>
    %23 = vector.extract_strided_slice %2 {offsets = [5, 0], sizes = [1, 128], strides = [1, 1]} : vector<6x128xf32> to vector<1x128xf32>
    %c5 = arith.constant 5 : index
    %24 = memref.load %arg2[%c5] : memref<6xf32, #tpu.memory_space<smem>>
    %25 = vector.broadcast %24 : f32 to vector<1x128xf32>
    %26 = arith.addf %23, %25 : vector<1x128xf32>
    %27 = arith.mulf %6, %6 : vector<1x128xf32>
    %28 = arith.mulf %10, %10 : vector<1x128xf32>
    %29 = arith.addf %27, %28 : vector<1x128xf32>
    %30 = arith.mulf %14, %14 : vector<1x128xf32>
    %31 = arith.addf %29, %30 : vector<1x128xf32>
    %cst_4 = arith.constant 1.000000e+00 : f32
    %32 = vector.broadcast %cst_4 : f32 to vector<1x128xf32>
    %33 = arith.addf %31, %32 : vector<1x128xf32>
    %34 = math.rsqrt %33 : vector<1x128xf32>
    %35 = arith.mulf %6, %34 : vector<1x128xf32>
    %36 = arith.mulf %10, %34 : vector<1x128xf32>
    %37 = arith.mulf %14, %34 : vector<1x128xf32>
    %38 = arith.mulf %34, %34 : vector<1x128xf32>
    %39 = arith.mulf %35, %35 : vector<1x128xf32>
    %40 = arith.mulf %36, %36 : vector<1x128xf32>
    %41 = arith.mulf %37, %37 : vector<1x128xf32>
    %42 = arith.mulf %34, %35 : vector<1x128xf32>
    %43 = arith.mulf %34, %36 : vector<1x128xf32>
    %44 = arith.mulf %34, %37 : vector<1x128xf32>
    %45 = arith.mulf %35, %36 : vector<1x128xf32>
    %46 = arith.mulf %35, %37 : vector<1x128xf32>
    %47 = arith.mulf %36, %37 : vector<1x128xf32>
    %48 = arith.addf %38, %39 : vector<1x128xf32>
    %49 = arith.subf %48, %40 : vector<1x128xf32>
    %50 = arith.subf %49, %41 : vector<1x128xf32>
    %51 = arith.subf %45, %44 : vector<1x128xf32>
    %cst_5 = arith.constant 2.000000e+00 : f32
    %52 = vector.broadcast %cst_5 : f32 to vector<1x128xf32>
    %53 = arith.mulf %52, %51 : vector<1x128xf32>
    %54 = arith.addf %46, %43 : vector<1x128xf32>
    %cst_6 = arith.constant 2.000000e+00 : f32
    %55 = vector.broadcast %cst_6 : f32 to vector<1x128xf32>
    %56 = arith.mulf %55, %54 : vector<1x128xf32>
    %57 = arith.addf %45, %44 : vector<1x128xf32>
    %cst_7 = arith.constant 2.000000e+00 : f32
    %58 = vector.broadcast %cst_7 : f32 to vector<1x128xf32>
    %59 = arith.mulf %58, %57 : vector<1x128xf32>
    %60 = arith.subf %38, %39 : vector<1x128xf32>
    %61 = arith.addf %60, %40 : vector<1x128xf32>
    %62 = arith.subf %61, %41 : vector<1x128xf32>
    %63 = arith.subf %47, %42 : vector<1x128xf32>
    %cst_8 = arith.constant 2.000000e+00 : f32
    %64 = vector.broadcast %cst_8 : f32 to vector<1x128xf32>
    %65 = arith.mulf %64, %63 : vector<1x128xf32>
    %66 = arith.subf %46, %43 : vector<1x128xf32>
    %cst_9 = arith.constant 2.000000e+00 : f32
    %67 = vector.broadcast %cst_9 : f32 to vector<1x128xf32>
    %68 = arith.mulf %67, %66 : vector<1x128xf32>
    %69 = arith.addf %47, %42 : vector<1x128xf32>
    %cst_10 = arith.constant 2.000000e+00 : f32
    %70 = vector.broadcast %cst_10 : f32 to vector<1x128xf32>
    %71 = arith.mulf %70, %69 : vector<1x128xf32>
    %72 = arith.subf %38, %39 : vector<1x128xf32>
    %73 = arith.subf %72, %40 : vector<1x128xf32>
    %74 = arith.addf %73, %41 : vector<1x128xf32>
    %75 = tpu.concatenate %50, %53, %56, %59, %62, %65, %68, %71, %74, %18, %22, %26 in 0 : vector<1x128xf32>, vector<1x128xf32>, vector<1x128xf32>, vector<1x128xf32>, vector<1x128xf32>, vector<1x128xf32>, vector<1x128xf32>, vector<1x128xf32>, vector<1x128xf32>, vector<1x128xf32>, vector<1x128xf32>, vector<1x128xf32> -> vector<12x128xf32>
    %c0_11 = arith.constant 0 : index
    %c0_12 = arith.constant 0 : index
    %76 = vector.load %arg4[%c0_11, %c0_12] : memref<12x128xf32, #tpu.memory_space<vmem>>, vector<12x128xf32>
    tpu.vector_store %arg4[%c0_11, %c0_12], %75 {strides = array<i32>} : memref<12x128xf32, #tpu.memory_space<vmem>>, vector<12x128xf32>,
    return
  }
  func.func @transform_0(%arg0: i32) -> (i32, i32) {
    %c0_i32 = arith.constant 0 : i32
    %c0_i32_0 = arith.constant 0 : i32
    %c0_i32_1 = arith.constant 0 : i32
    return %c0_i32, %c0_i32_0 : i32, i32
  }
  func.func @transform_1(%arg0: i32) -> i32 {
    %c0_i32 = arith.constant 0 : i32
    %c0_i32_0 = arith.constant 0 : i32
    return %c0_i32 : i32
  }
  func.func @transform_2(%arg0: i32) -> (i32, i32) {
    %c0_i32 = arith.constant 0 : i32
    %c0_i32_0 = arith.constant 0 : i32
    return %arg0, %c0_i32 : i32, i32
  }
  func.func @transform_3(%arg0: i32) -> (i32, i32) {
    %c0_i32 = arith.constant 0 : i32
    %c0_i32_0 = arith.constant 0 : i32
    return %c0_i32, %arg0 : i32, i32
  }
}

</mosaic_0001>

<llo_original>
// kernel: tpu_custom_call.1
$region0: #{tpu_custom_call.1}
  #allocation0 [shape = 'u32[]', space=smem, size = 0x4, offset = 0x4, fixed_abs, tag = 'smem constant byte address 0x4 - core index']
  #allocation1 [shape = 'u32[144,128]{1,0:T(1,128)}', space=vmem, size = 0x12000, scoped, tag = 'internal scratch']
  %s0 = inlined_call_operand.hbm [shape: f32[6,32], index: 0, kind: input, shape index: {}]
  %s1 = inlined_call_operand.vmem [shape: f32[6], index: 1, kind: input, shape index: {}]
  %s2 = inlined_call_operand.hbm [shape: f32[16,32], index: 2, kind: input, shape index: {}]
  %s3 = inlined_call_operand.hbm [shape: f32[12,16], index: 3, kind: output, shape index: {}]
  %s4 = sld [smem:[#allocation0]]
  $region34: #{tpu_custom_call.1} parent=0
    _
  %s6 = ssub.s32 1, %s4
  %s7 = scalar_select 0, %s6, %s4
  $region1: #{tpu_custom_call.1} parent=0
    #allocation2 [shape = 'u8[4096]{0}', space=vmem, size = 0x1000, scoped, tag = 'input window, operand 0, single buffered']
    #allocation3 [shape = 's32[1]{0}', space=sflag, size = 0x4, scoped, tag = 'scoped memory for tpu_custom_call.1']
    #allocation4 [shape = 's32[1]{0}', space=sflag, size = 0x4, scoped, tag = 'scoped memory for tpu_custom_call.1']
    #allocation5 [shape = 's32[1]{0}', space=sflag, size = 0x4, scoped, tag = 'scoped memory for tpu_custom_call.1']
    #allocation6 [shape = 'u8[512]{0}', space=smem, size = 0x200, scoped, tag = 'input window, operand 1, single buffered']
    #allocation7 [shape = 'u8[65536]{0}', space=vmem, size = 0x10000, scoped, tag = 'input window, operand 2, single buffered']
    #allocation8 [shape = 's32[1]{0}', space=sflag, size = 0x4, scoped, tag = 'scoped memory for tpu_custom_call.1']
    #allocation9 [shape = 'u8[8192]{0}', space=vmem, size = 0x2000, scoped, tag = 'output window, operand 0, single buffered']
    %8 = vsyncpa [#allocation3], 0
    %9 = vsyncpa [#allocation5], 0
    %10 = vsyncpa [#allocation8], 0
    %11 = vsyncpa [#allocation4], 0
    // Predicated region
    $region2: #{tpu_custom_call.1} parent=1 // pred_check
      _
    $region3: #{tpu_custom_call.1} parent=1 // pred_check_branch
      %13 = sbr.rel (0) target = $region5
    $region4: #{tpu_custom_call.1} parent=1 // pred_region
      %s15 = ssub.s32 128, 128
      %16 = vsyncadd [#allocation3], %s15
      %s18 = sshll.u32 [#allocation2], 4
      %s19 = int_to_ptr.vmem [resolvable:$true] %s18
      %21 = dma.hbm_to_vmem [thread:$0]  %s0, 128, %s19, [#allocation3]
    $region5: #{tpu_custom_call.1} parent=1 // pred_fallthru
      _
    // Predicated region
    $region6: #{tpu_custom_call.1} parent=1 // pred_check
      _
    $region7: #{tpu_custom_call.1} parent=1 // pred_check_branch
      %23 = sbr.rel (0) target = $region9
    $region8: #{tpu_custom_call.1} parent=1 // pred_region
      %s25 = ssub.s32 16, 16
      %26 = vsyncadd [#allocation5], %s25
      %s28 = sshll.u32 %s1, 4
      %s29 = int_to_ptr.vmem [resolvable:$true] %s28
      %31 = dma.vmem_to_smem %s29, 16, [#allocation6], [#allocation5]
    $region9: #{tpu_custom_call.1} parent=1 // pred_fallthru
      _
    // Predicated region
    $region10: #{tpu_custom_call.1} parent=1 // pred_check
      _
    $region11: #{tpu_custom_call.1} parent=1 // pred_check_branch
      %33 = sbr.rel (0) target = $region13
    $region12: #{tpu_custom_call.1} parent=1 // pred_region
      %s35 = ssub.s32 2048, 256
      %36 = vsyncadd [#allocation8], %s35
      %s37 = sshll.u32 [#allocation7], 4
      %s38 = int_to_ptr.vmem [resolvable:$true] %s37
      %43 = dma.hbm_to_vmem [thread:$0]  %s2, 256, %s38, [#allocation8], 128, 128, 8
    $region13: #{tpu_custom_call.1} parent=1 // pred_fallthru
      _
    // Predicated region
    $region14: #{tpu_custom_call.1} parent=1 // pred_check
      _
    $region15: #{tpu_custom_call.1} parent=1 // pred_check_branch
      %45 = sbr.rel (0) target = $region17
    $region16: #{tpu_custom_call.1} parent=1 // pred_region
      %46 = dma.done [#allocation3], 128
    $region17: #{tpu_custom_call.1} parent=1 // pred_fallthru
      _
    // Predicated region
    $region18: #{tpu_custom_call.1} parent=1 // pred_check
      _
    $region19: #{tpu_custom_call.1} parent=1 // pred_check_branch
      %48 = sbr.rel (0) target = $region21
    $region20: #{tpu_custom_call.1} parent=1 // pred_region
      %49 = dma.done [#allocation5], 16
    $region21: #{tpu_custom_call.1} parent=1 // pred_fallthru
      _
    // Predicated region
    $region22: #{tpu_custom_call.1} parent=1 // pred_check
      _
    $region23: #{tpu_custom_call.1} parent=1 // pred_check_branch
      %51 = sbr.rel (0) target = $region25
    $region24: #{tpu_custom_call.1} parent=1 // pred_region
      %52 = dma.done [#allocation8], 2048
    $region25: #{tpu_custom_call.1} parent=1 // pred_fallthru
      _
    %53 = sfence
    %v54 = vld [vmem:[#allocation2] sm:$0x3f]
    %v55 = vld [vmem:[#allocation7] sm:$0xff]
    %v56 = vld [vmem:[#allocation7 + $0x8] sm:$0xff]
    %v57 = vld [vmem:[#allocation7 + $0x10] sm:$0xff]
    %v58 = vld [vmem:[#allocation7 + $0x18] sm:$0xff]
    %v59 = vld [vmem:[#allocation7 + $0x20] sm:$0xff]
    %v60 = vld [vmem:[#allocation7 + $0x28] sm:$0xff]
    %v61 = vld [vmem:[#allocation7 + $0x30] sm:$0xff]
    %v62 = vld [vmem:[#allocation7 + $0x38] sm:$0xff]
    %v63 = vld [vmem:[#allocation7 + $0x40] sm:$0xff]
    %v64 = vld [vmem:[#allocation7 + $0x48] sm:$0xff]
    %v65 = vld [vmem:[#allocation7 + $0x50] sm:$0xff]
    %v66 = vld [vmem:[#allocation7 + $0x58] sm:$0xff]
    %v67 = vld [vmem:[#allocation7 + $0x60] sm:$0xff]
    %v68 = vld [vmem:[#allocation7 + $0x68] sm:$0xff]
    %v69 = vld [vmem:[#allocation7 + $0x70] sm:$0xff]
    %v70 = vld [vmem:[#allocation7 + $0x78] sm:$0xff]
    %vm71 = vcmask 261120
    %v73 = vsel %vm71, %v54, 0
    %v76 = vsel %vm71, %v55, 0
    %v79 = vsel %vm71, %v56, 0
    %v82 = vsel %vm71, %v57, 0
    %v85 = vsel %vm71, %v58, 0
    %v88 = vsel %vm71, %v59, 0
    %v91 = vsel %vm71, %v60, 0
    %v94 = vsel %vm71, %v61, 0
    %v97 = vsel %vm71, %v62, 0
    %v100 = vsel %vm71, %v63, 0
    %v103 = vsel %vm71, %v64, 0
    %v106 = vsel %vm71, %v65, 0
    %v109 = vsel %vm71, %v66, 0
    %v112 = vsel %vm71, %v67, 0
    %v115 = vsel %vm71, %v68, 0
    %v118 = vsel %vm71, %v69, 0
    %v121 = vsel %vm71, %v70, 0
    %123 = vmatprep.subr.mxu0 0.0
    %124 = vmatpush1.xpose.msra.mxu0 %v76
    %125 = vmatprep.subr.mxu0 0.0
    %126 = vmatpush1.xpose.msra.mxu0 %v79
    %127 = vmatprep.subr.mxu0 0.0
    %128 = vmatpush1.xpose.msra.mxu0 %v82
    %129 = vmatprep.subr.mxu0 0.0
    %130 = vmatpush1.xpose.msra.mxu0 %v85
    %131 = vmatprep.subr.mxu0 0.0
    %132 = vmatpush1.xpose.msra.mxu0 %v88
    %133 = vmatprep.subr.mxu0 0.0
    %134 = vmatpush1.xpose.msra.mxu0 %v91
    %135 = vmatprep.subr.mxu0 0.0
    %136 = vmatpush1.xpose.msra.mxu0 %v94
    %137 = vmatprep.subr.mxu0 0.0
    %138 = vmatpush1.xpose.msra.mxu0 %v97
    %139 = vmatprep.subr.mxu0 0.0
    %140 = vmatpush1.xpose.msra.mxu0 %v100
    %141 = vmatprep.subr.mxu0 0.0
    %142 = vmatpush1.xpose.msra.mxu0 %v103
    %143 = vmatprep.subr.mxu0 0.0
    %144 = vmatpush1.xpose.msra.mxu0 %v106
    %145 = vmatprep.subr.mxu0 0.0
    %146 = vmatpush1.xpose.msra.mxu0 %v109
    %147 = vmatprep.subr.mxu0 0.0
    %148 = vmatpush1.xpose.msra.mxu0 %v112
    %149 = vmatprep.subr.mxu0 0.0
    %150 = vmatpush1.xpose.msra.mxu0 %v115
    %151 = vmatprep.subr.mxu0 0.0
    %152 = vmatpush1.xpose.msra.mxu0 %v118
    %153 = vmatprep.subr.mxu0 0.0
    %154 = vmatpush1.xpose.msra.mxu0 %v121
    %155 = vmatprep.subr.mxu0 0.0
    %156 = vmatpush1.xpose.msra.mxu0 0.0
    %157 = vmatprep.subr.mxu0 0.0
    %158 = vmatpush1.xpose.msra.mxu0 0.0
    %159 = vmatprep.subr.mxu0 0.0
    %160 = vmatpush1.xpose.msra.mxu0 0.0
    %161 = vmatprep.subr.mxu0 0.0
    %162 = vmatpush1.xpose.msra.mxu0 0.0
    %163 = vmatprep.subr.mxu0 0.0
    %164 = vmatpush1.xpose.msra.mxu0 0.0
    %165 = vmatprep.subr.mxu0 0.0
    %166 = vmatpush1.xpose.msra.mxu0 0.0
    %167 = vmatprep.subr.mxu0 0.0
    %168 = vmatpush1.xpose.msra.mxu0 0.0
    %169 = vmatprep.subr.mxu0 0.0
    %170 = vmatpush1.xpose.msra.mxu0 0.0
    %171 = vmatprep.subr.mxu0 0.0
    %172 = vmatpush1.xpose.msra.mxu0 0.0
    %173 = vmatprep.subr.mxu0 0.0
    %174 = vmatpush1.xpose.msra.mxu0 0.0
    %175 = vmatprep.subr.mxu0 0.0
    %176 = vmatpush1.xpose.msra.mxu0 0.0
    %177 = vmatprep.subr.mxu0 0.0
    %178 = vmatpush1.xpose.msra.mxu0 0.0
    %179 = vmatprep.subr.mxu0 0.0
    %180 = vmatpush1.xpose.msra.mxu0 0.0
    %181 = vmatprep.subr.mxu0 0.0
    %182 = vmatpush1.xpose.msra.mxu0 0.0
    %183 = vmatprep.subr.mxu0 0.0
    %184 = vmatpush1.xpose.msra.mxu0 0.0
    %185 = vmatprep.subr.mxu0 0.0
    %186 = vmatpush1.xpose.msra.mxu0 0.0
    %187 = vmatprep.mubr.f32.mxu0 0.0
    %188 = vmatmul.mubr.f32.gmra.mrb[0].mxu0 %v73
    %v189 = vpop.f32.mrb[0].mxu0
    %v190 = vadd.f32 0.0, %v189
    %v191 = vpop.f32.mrb[0].mxu0
    %192 = vdwg.mxu0
    %s193 = sld [smem:[#allocation6]]
    %v194 = vstv %s193
    %v195 = vadd.f32 %v190, %v194
    %s196 = sld [smem:[#allocation6 + $0x1]]
    %v197 = vstv %s196
    %v198 = vadd.f32 %v190, %v197
    %s199 = sld [smem:[#allocation6 + $0x2]]
    %v200 = vstv %s199
    %v201 = vadd.f32 %v190, %v200
    %s202 = sld [smem:[#allocation6 + $0x3]]
    %v203 = vstv %s202
    %v204 = vadd.f32 %v190, %v203
    %s205 = sld [smem:[#allocation6 + $0x4]]
    %v206 = vstv %s205
    %v207 = vadd.f32 %v190, %v206
    %s208 = sld [smem:[#allocation6 + $0x5]]
    %v209 = vstv %s208
    %v210 = vadd.f32 %v190, %v209
    %v211 = vmul.f32 %v195, %v195
    %v212 = vmul.f32 %v198, %v198
    %v214 = vrot.slane %v212, 1
    %v216 = vadd.f32 %v211, %v214
    %v217 = vmul.f32 %v201, %v201
    %v219 = vrot.slane %v217, 2
    %v221 = vadd.f32 %v216, %v219
    %v222 = vadd.f32 %v221, 1.0
    %v223 = vrsqrt.pop %v222
    %v224 = vmul.f32 %v195, %v223
    %v226 = vrot.slane %v223, 7
    %v228 = vmul.f32 %v198, %v226
    %v229 = vrot.slane %v223, 6
    %v231 = vmul.f32 %v201, %v229
    %v232 = vmul.f32 %v223, %v223
    %v233 = vmul.f32 %v224, %v224
    %v234 = vmul.f32 %v228, %v228
    %v235 = vmul.f32 %v231, %v231
    %v236 = vmul.f32 %v223, %v224
    %v238 = vrot.slane %v228, 1
    %v240 = vmul.f32 %v223, %v238
    %v242 = vrot.slane %v231, 2
    %v244 = vmul.f32 %v223, %v242
    %v245 = vmul.f32 %v224, %v238
    %v246 = vmul.f32 %v224, %v242
    %v247 = vrot.slane %v231, 1
    %v249 = vmul.f32 %v228, %v247
    %v250 = vadd.f32 %v232, %v233
    %v252 = vrot.slane %v234, 1
    %v254 = vsub.f32 %v250, %v252
    %v256 = vrot.slane %v235, 2
    %v258 = vsub.f32 %v254, %v256
    %v259 = vsub.f32 %v245, %v244
    %v260 = vmul.f32 %v259, 2.0
    %v261 = vadd.f32 %v246, %v240
    %v262 = vmul.f32 %v261, 2.0
    %v263 = vadd.f32 %v245, %v244
    %v264 = vmul.f32 %v263, 2.0
    %v265 = vsub.f32 %v232, %v233
    %v266 = vadd.f32 %v265, %v252
    %v267 = vsub.f32 %v266, %v256
    %v269 = vrot.slane %v236, 7
    %v271 = vsub.f32 %v249, %v269
    %v272 = vmul.f32 %v271, 2.0
    %v273 = vsub.f32 %v246, %v240
    %v274 = vmul.f32 %v273, 2.0
    %v275 = vadd.f32 %v249, %v269
    %v276 = vmul.f32 %v275, 2.0
    %v277 = vsub.f32 %v265, %v252
    %v278 = vadd.f32 %v277, %v256
    %v280 = vrot.slane %v260, 7
    %v283 = vrot.slane %v262, 6
    %v286 = vrot.slane %v264, 5
    %v289 = vrot.slane %v267, 4
    %v292 = vrot.slane %v272, 4
    %v295 = vrot.slane %v274, 2
    %v298 = vrot.slane %v276, 2
    %v301 = vrot.slane %v204, 2
    %v304 = vrot.slane %v207, 2
    %v307 = vrot.slane %v210, 2
    %vm309 = vcmask 1040384
    %v310 = vsel %vm309, %v258, %v280
    %vm311 = vcmask 1041408
    %v312 = vsel %vm311, %v310, %v283
    %vm313 = vcmask 1042432
    %v314 = vsel %vm313, %v312, %v286
    %vm315 = vcmask 1043456
    %v316 = vsel %vm315, %v314, %v289
    %vm317 = vcmask 1044480
    %v318 = vsel %vm317, %v316, %v292
    %vm319 = vcmask 1045504
    %v320 = vsel %vm319, %v318, %v295
    %vm321 = vcmask 1046528
    %v322 = vsel %vm321, %v320, %v298
    %v323 = vsel %vm309, %v278, %v301
    %v324 = vsel %vm311, %v323, %v304
    %v325 = vsel %vm313, %v324, %v307
    %326 = vst [vmem:[#allocation9] sm:$0xff] %v322
    %327 = vst [vmem:[#allocation9 + $0x8] sm:$0xf] %v325
    // Predicated region
    $region26: #{tpu_custom_call.1} parent=1 // pred_check
      _
    $region27: #{tpu_custom_call.1} parent=1 // pred_check_branch
      %329 = sbr.rel (0) target = $region29
    $region28: #{tpu_custom_call.1} parent=1 // pred_region
      %s331 = ssub.s32 256, 256
      %332 = vsyncadd [#allocation4], %s331
      %s333 = sshll.u32 [#allocation9], 4
      %s334 = int_to_ptr.vmem [resolvable:$true] %s333
      %339 = dma.vmem_to_hbm [thread:$0]  %s334, 256, %s3, [#allocation4], 128, 128, 8
    $region29: #{tpu_custom_call.1} parent=1 // pred_fallthru
      _
    // Predicated region
    $region30: #{tpu_custom_call.1} parent=1 // pred_check
      _
    $region31: #{tpu_custom_call.1} parent=1 // pred_check_branch
      %341 = sbr.rel (0) target = $region33
    $region32: #{tpu_custom_call.1} parent=1 // pred_region
      %342 = dma.done [#allocation4], 256
    $region33: #{tpu_custom_call.1} parent=1 // pred_fallthru
      _
    %343 = vsyncpa [#allocation3], 1
    %344 = vsyncpa [#allocation8], 1
    %345 = vsyncpa [#allocation4], 1
    %346 = vsyncpa [#allocation5], 1

</llo_original>
